<compile_context>
chip_gen: v5e
topology: v5e:2x2
jax: 0.10.0
libtpu: 0.0.40
codegen_flags: <defaults>
</compile_context>

<pallas_src>
import jax
import jax.numpy as jnp
from jax.experimental import pallas as pl
from jax.experimental.pallas import tpu as pltpu

EPS = 0.01
D = 1.0
REHU_A = 1.0 / D       # a = 1/d
REHU_B = -D / 2.0      # b = -d/2


def _makepsd_kernel(x_ref, w1_ref, b1_ref, w2_ref, b2eff_ref, o_ref):
    x = x_ref[...]                                        # (TB, n), f32 or bf16
    xf = x.astype(jnp.float32)                            # no-op in the f32 path

    # --- f(x) hidden layer: MXU matmul (f32 accumulate) + EUP tanh ---
    h = jnp.tanh(
        jnp.dot(x, w1_ref[...], preferred_element_type=jnp.float32)
        + b1_ref[...]                                     # (1, H) broadcast
    )                                                     # (TB, H) f32

    # --- second layer: single-column MXU matmul; f(0) folded into the bias,
    #     so y == f(x) - f(0).  b2_eff is an SMEM scalar (scalar path read). ---
    y = (
        jnp.dot(h, w2_ref[...], preferred_element_type=jnp.float32)   # (TB, 1)
        + b2eff_ref[0, 0]
    )

    # --- ReHU(y):  sign(y)*y*y == y*|y| (identical, incl. y == 0) ---
    quad_branch = (REHU_A * 0.5) * y * jnp.abs(y)
    rehu = jnp.maximum(jnp.clip(quad_branch, 0.0, -REHU_B), y + REHU_B)

    # --- eps * sum(x**2, axis=1, keepdims=True) on the MXU (ones column),
    #     eps applied AFTER the sum to match the reference ordering.
    #     Kept OUTSIDE the ReHU (must not be fused into y). ---
    n = xf.shape[1]
    ones_col = jnp.ones((n, 1), dtype=jnp.float32)
    quad_under = EPS * jnp.dot(xf * xf, ones_col,
                               preferred_element_type=jnp.float32)    # (TB, 1)

    o_ref[...] = rehu + quad_under


def _round_up(v, m):
    return ((v + m - 1) // m) * m


def make_psd_forward(x, w1, b1, w2, b2, zero, *,
                     use_bf16_matmul=False, max_block_b=8192):
    """MakePSD forward. x:(B,n), w1:(n,H), b1:(1,H), w2:(H,1), b2:(1,1), zero:(1,1)."""
    B, n = x.shape
    H = w1.shape[1]

    in_dtype = jnp.bfloat16 if use_bf16_matmul else jnp.float32
    x_in = x.astype(in_dtype)
    w1_in = w1.astype(in_dtype)
    b1_f = b1.reshape(1, H).astype(jnp.float32)
    w2_col = w2.reshape(H, 1).astype(jnp.float32)
    b2_eff = (b2 - zero).reshape(1, 1).astype(jnp.float32)  # fold f(0) into the bias

    # Tile / grid selection: minimize grid steps (~0.35 us each).  Single step
    # for small B; exactly 2 steps otherwise so both v7x TensorCores get work.
    if B <= 16:
        tb = B
    else:
        tb = min(_round_up(pl.cdiv(B, 2), 8), max_block_b)
    grid = (pl.cdiv(B, tb),)

    resident = lambda shape: pl.BlockSpec(shape, lambda i: (0, 0))

    itemsize = jnp.dtype(in_dtype).itemsize
    cost = pl.CostEstimate(
        flops=2 * B * n * H + 2 * B * H + 2 * B * n,
        transcendentals=B * H,
        bytes_accessed=(B * n * itemsize                     # x
                        + B * 4                              # output
                        + n * H * itemsize + (2 * H + 1) * 4),  # params
    )

    return pl.pallas_call(
        _makepsd_kernel,
        out_shape=jax.ShapeDtypeStruct((B, 1), jnp.float32),
        grid=grid,
        in_specs=[
            pl.BlockSpec((tb, n), lambda i: (i, 0)),             # x: tiled over batch
            resident((n, H)),                                    # W1 (resident)
            resident((1, H)),                                    # b1 (resident)
            resident((H, 1)),                                    # W2 column (resident)
            pl.BlockSpec(memory_space=pltpu.MemorySpace.SMEM),   # b2_eff scalar in SMEM
        ],
        out_specs=pl.BlockSpec((tb, 1), lambda i: (i, 0)),
        compiler_params=pltpu.CompilerParams(
            dimension_semantics=("parallel",),   # batch tiles independent; 2 TCs on v7x
        ),
        cost_estimate=cost,
    )(x_in, w1_in, b1_f, w2_col, b2_eff)


# ----------------------------- references -----------------------------------

def _f_reference(x, w1, b1, w2, b2):
    # Plain-JAX inner network f (used for zero = f(0), mirroring MakePSD.__init__,
    # and for the correctness check).
    return jnp.tanh(x @ w1 + b1) @ w2 + b2


def _rehu_reference(y):
    return jnp.maximum(
        jnp.clip(jnp.sign(y) * (REHU_A / 2.0) * y * y, 0.0, -REHU_B),
        y + REHU_B,
    )


def _makepsd_reference(x, w1, b1, w2, b2, zero):
    return _rehu_reference(_f_reference(x, w1, b1, w2, b2) - zero) + EPS * jnp.sum(
        x * x, axis=1, keepdims=True
    )


if __name__ == "__main__":
    key = jax.random.PRNGKey(0)
    k_x, k_w1, k_b1, k_w2, k_b2, k_x2 = jax.random.split(key, 6)

    B, n, H = 8, 32, 64

    # Deterministic parameter init (uniform, PyTorch-Linear-like scale).
    bound1 = 1.0 / (n ** 0.5)
    bound2 = 1.0 / (H ** 0.5)
    w1 = jax.random.uniform(k_w1, (n, H), jnp.float32, -bound1, bound1)
    b1 = jax.random.uniform(k_b1, (1, H), jnp.float32, -bound1, bound1)
    w2 = jax.random.uniform(k_w2, (H, 1), jnp.float32, -bound2, bound2)
    b2 = jax.random.uniform(k_b2, (1, 1), jnp.float32, -bound2, bound2)

    # zero = f(zeros(1, n))  (frozen parameter in the PyTorch module)
    zero = _f_reference(jnp.zeros((1, n), jnp.float32), w1, b1, w2, b2)  # (1, 1)

    # --- small batch (single grid step, f32 path) ---
    x = jax.random.normal(k_x, (B, n), jnp.float32)
    out = jax.block_until_ready(make_psd_forward(x, w1, b1, w2, b2, zero))
    ref = _makepsd_reference(x, w1, b1, w2, b2, zero)
    assert out.shape == (B, 1)
    assert jnp.allclose(out, ref, atol=1e-5, rtol=1e-5)

    # --- larger batch (2-step grid: one tile per v7x TensorCore, f32 path) ---
    B2 = 1024
    x2 = jax.random.normal(k_x2, (B2, n), jnp.float32)
    out2 = jax.block_until_ready(make_psd_forward(x2, w1, b1, w2, b2, zero))
    ref2 = _makepsd_reference(x2, w1, b1, w2, b2, zero)
    assert out2.shape == (B2, 1)
    assert jnp.allclose(out2, ref2, atol=1e-5, rtol=1e-5)

    # --- bf16 MXU path (numerics change vs f32 reference; loose tolerance) ---
    out3 = jax.block_until_ready(
        make_psd_forward(x2, w1, b1, w2, b2, zero, use_bf16_matmul=True)
    )
    assert out3.shape == (B2, 1)
    assert jnp.allclose(out3, ref2, atol=1e-1, rtol=1e-1)

    print("KERNEL_OK")
</pallas_src>

<mosaic_0001>
module attributes {stable_mosaic.version = 11 : i64} {
  func.func @_makepsd_kernel(%arg0: i32, %arg1: memref<8x32xf32, #tpu.memory_space<vmem>>, %arg2: memref<32x64xf32, #tpu.memory_space<vmem>>, %arg3: memref<1x64xf32, #tpu.memory_space<vmem>>, %arg4: memref<64x1xf32, #tpu.memory_space<vmem>>, %arg5: memref<1x1xf32, #tpu.memory_space<smem>>, %arg6: memref<8x1xf32, #tpu.memory_space<vmem>>) attributes {dimension_semantics = [#tpu.dimension_semantics<parallel>], iteration_bounds = array<i64: 1>, scalar_prefetch = 0 : i64, scratch_operands = 0 : i64, tpu.core_type = #tpu.core_type<tc>, window_params = [{transform_indices = @transform_0, window_bounds = array<i64: 8, 32>}, {pipeline_mode = #tpu.pipeline_mode<synchronous>, transform_indices = @transform_1, window_bounds = array<i64: 32, 64>}, {pipeline_mode = #tpu.pipeline_mode<synchronous>, transform_indices = @transform_2, window_bounds = array<i64: 1, 64>}, {pipeline_mode = #tpu.pipeline_mode<synchronous>, transform_indices = @transform_3, window_bounds = array<i64: 64, 1>}, {transform_indices = @transform_4, window_bounds = array<i64: 1, 1>}, {transform_indices = @transform_5, window_bounds = array<i64: 8, 1>}]} {
    %c0 = arith.constant 0 : index
    %c0_0 = arith.constant 0 : index
    %0 = vector.load %arg1[%c0, %c0_0] : memref<8x32xf32, #tpu.memory_space<vmem>>, vector<8x32xf32>
    %c0_1 = arith.constant 0 : index
    %c0_2 = arith.constant 0 : index
    %1 = vector.load %arg2[%c0_1, %c0_2] : memref<32x64xf32, #tpu.memory_space<vmem>>, vector<32x64xf32>
    %cst = arith.constant dense<0.000000e+00> : vector<8x64xf32>
    %2 = tpu.matmul %0, %1, %cst {dimension_numbers = #tpu.dot_dimension_numbers<[1], [0], [0], [1], [0, 0, 1, 1], [], []>} : vector<8x32xf32>, vector<32x64xf32>, vector<8x64xf32> -> vector<8x64xf32>
    %c0_3 = arith.constant 0 : index
    %c0_4 = arith.constant 0 : index
    %3 = vector.load %arg3[%c0_3, %c0_4] : memref<1x64xf32, #tpu.memory_space<vmem>>, vector<1x64xf32>
    %4 = vector.broadcast %3 : vector<1x64xf32> to vector<8x64xf32>
    %5 = arith.addf %2, %4 : vector<8x64xf32>
    %6 = math.tanh %5 : vector<8x64xf32>
    %c0_5 = arith.constant 0 : index
    %c0_6 = arith.constant 0 : index
    %7 = vector.load %arg4[%c0_5, %c0_6] : memref<64x1xf32, #tpu.memory_space<vmem>>, vector<64x1xf32>
    %cst_7 = arith.constant dense<0.000000e+00> : vector<8x1xf32>
    %8 = tpu.matmul %6, %7, %cst_7 {dimension_numbers = #tpu.dot_dimension_numbers<[1], [0], [0], [1], [0, 0, 1, 1], [], []>} : vector<8x64xf32>, vector<64x1xf32>, vector<8x1xf32> -> vector<8x1xf32>
    %c0_8 = arith.constant 0 : index
    %c0_9 = arith.constant 0 : index
    %9 = memref.load %arg5[%c0_8, %c0_9] : memref<1x1xf32, #tpu.memory_space<smem>>
    %10 = vector.broadcast %9 : f32 to vector<8x1xf32>
    %11 = arith.addf %8, %10 : vector<8x1xf32>
    %cst_10 = arith.constant 5.000000e-01 : f32
    %12 = vector.broadcast %cst_10 : f32 to vector<8x1xf32>
    %13 = arith.mulf %12, %11 : vector<8x1xf32>
    %14 = math.absf %11 : vector<8x1xf32>
    %15 = arith.mulf %13, %14 : vector<8x1xf32>
    %cst_11 = arith.constant 0.000000e+00 : f32
    %cst_12 = arith.constant 5.000000e-01 : f32
    %16 = vector.broadcast %cst_11 : f32 to vector<8x1xf32>
    %17 = arith.maximumf %16, %15 : vector<8x1xf32>
    %18 = vector.broadcast %cst_12 : f32 to vector<8x1xf32>
    %19 = arith.minimumf %18, %17 : vector<8x1xf32>
    %cst_13 = arith.constant -5.000000e-01 : f32
    %20 = vector.broadcast %cst_13 : f32 to vector<8x1xf32>
    %21 = arith.addf %11, %20 : vector<8x1xf32>
    %22 = arith.maximumf %19, %21 : vector<8x1xf32>
    %cst_14 = arith.constant 1.000000e+00 : f32
    %23 = vector.broadcast %cst_14 : f32 to vector<32x1xf32>
    %24 = arith.mulf %0, %0 : vector<8x32xf32>
    %cst_15 = arith.constant dense<0.000000e+00> : vector<8x1xf32>
    %25 = tpu.matmul %24, %23, %cst_15 {dimension_numbers = #tpu.dot_dimension_numbers<[1], [0], [0], [1], [0, 0, 1, 1], [], []>} : vector<8x32xf32>, vector<32x1xf32>, vector<8x1xf32> -> vector<8x1xf32>
    %cst_16 = arith.constant 0.00999999977 : f32
    %26 = vector.broadcast %cst_16 : f32 to vector<8x1xf32>
    %27 = arith.mulf %26, %25 : vector<8x1xf32>
    %28 = arith.addf %22, %27 : vector<8x1xf32>
    %c0_17 = arith.constant 0 : index
    %c0_18 = arith.constant 0 : index
    %29 = vector.load %arg6[%c0_17, %c0_18] : memref<8x1xf32, #tpu.memory_space<vmem>>, vector<8x1xf32>
    tpu.vector_store %arg6[%c0_17, %c0_18], %28 {strides = array<i32>} : memref<8x1xf32, #tpu.memory_space<vmem>>, vector<8x1xf32>,
    return
  }
  func.func @transform_0(%arg0: i32) -> (i32, i32) {
    %c0_i32 = arith.constant 0 : i32
    %c0_i32_0 = arith.constant 0 : i32
    return %arg0, %c0_i32 : i32, i32
  }
  func.func @transform_1(%arg0: i32) -> (i32, i32) {
    %c0_i32 = arith.constant 0 : i32
    %c0_i32_0 = arith.constant 0 : i32
    %c0_i32_1 = arith.constant 0 : i32
    return %c0_i32, %c0_i32_0 : i32, i32
  }
  func.func @transform_2(%arg0: i32) -> (i32, i32) {
    %c0_i32 = arith.constant 0 : i32
    %c0_i32_0 = arith.constant 0 : i32
    %c0_i32_1 = arith.constant 0 : i32
    return %c0_i32, %c0_i32_0 : i32, i32
  }
  func.func @transform_3(%arg0: i32) -> (i32, i32) {
    %c0_i32 = arith.constant 0 : i32
    %c0_i32_0 = arith.constant 0 : i32
    %c0_i32_1 = arith.constant 0 : i32
    return %c0_i32, %c0_i32_0 : i32, i32
  }
  func.func @transform_4(%arg0: i32) -> (i32, i32) {
    %c0_i32 = arith.constant 0 : i32
    %c0_i32_0 = arith.constant 0 : i32
    %c0_i32_1 = arith.constant 0 : i32
    return %c0_i32, %c0_i32_0 : i32, i32
  }
  func.func @transform_5(%arg0: i32) -> (i32, i32) {
    %c0_i32 = arith.constant 0 : i32
    %c0_i32_0 = arith.constant 0 : i32
    return %arg0, %c0_i32 : i32, i32
  }
}

</mosaic_0001>

<llo_original>
// kernel: tpu_custom_call.1
$region0: #{tpu_custom_call.1}
  #allocation0 [shape = 'u32[]', space=smem, size = 0x4, offset = 0x4, fixed_abs, tag = 'smem constant byte address 0x4 - core index']
  #allocation1 [shape = 'u32[72,128]{1,0:T(1,128)}', space=vmem, size = 0x9000, scoped, tag = 'internal scratch']
  #allocation2 [shape = 'f32[1,1]{1,0:T(1,128)S(6)}', space=smem, size = 0x200, scoped, tag = 'scoped memory for tpu_custom_call.1']
  %s0 = inlined_call_operand.vmem [shape: f32[8,32], index: 0, kind: input, shape index: {}]
  %s1 = inlined_call_operand.vmem [shape: f32[32,64], index: 1, kind: input, shape index: {}]
  %s2 = inlined_call_operand.vmem [shape: f32[1,64], index: 2, kind: input, shape index: {}]
  %s3 = inlined_call_operand.vmem [shape: f32[64,1], index: 3, kind: input, shape index: {}]
  %s4 = inlined_call_operand.<no memory space> [shape: f32[1,1], index: 4, kind: input, shape index: {}]
  %s5 = inlined_call_operand.vmem [shape: f32[8,1], index: 5, kind: output, shape index: {}]
  %s6 = sld [smem:[#allocation0]]
  $region30: #{tpu_custom_call.1} parent=0
    _
  %s8 = ssub.s32 1, %s6
  %s9 = scalar_select 0, %s8, %s6
  %10 = sst [smem:[#allocation2]] %s4
  // Predicated region
  $region2: #{tpu_custom_call.1} parent=0 // pred_check
    _
  $region3: #{tpu_custom_call.1} parent=0 // pred_check_branch
    %12 = sbr.rel (0) target = $region5
  $region4: #{tpu_custom_call.1} parent=0 // pred_region
    _
  $region5: #{tpu_custom_call.1} parent=0 // pred_fallthru
    _
  // Predicated region
  $region6: #{tpu_custom_call.1} parent=0 // pred_check
    _
  $region7: #{tpu_custom_call.1} parent=0 // pred_check_branch
    %14 = sbr.rel (0) target = $region9
  $region8: #{tpu_custom_call.1} parent=0 // pred_region
    _
  $region9: #{tpu_custom_call.1} parent=0 // pred_fallthru
    _
  // Predicated region
  $region10: #{tpu_custom_call.1} parent=0 // pred_check
    _
  $region11: #{tpu_custom_call.1} parent=0 // pred_check_branch
    %16 = sbr.rel (0) target = $region13
  $region12: #{tpu_custom_call.1} parent=0 // pred_region
    _
  $region13: #{tpu_custom_call.1} parent=0 // pred_fallthru
    _
  // Predicated region
  $region14: #{tpu_custom_call.1} parent=0 // pred_check
    _
  $region15: #{tpu_custom_call.1} parent=0 // pred_check_branch
    %18 = sbr.rel (0) target = $region17
  $region16: #{tpu_custom_call.1} parent=0 // pred_region
    _
  $region17: #{tpu_custom_call.1} parent=0 // pred_fallthru
    _
  // Predicated region
  $region18: #{tpu_custom_call.1} parent=0 // pred_check
    _
  $region19: #{tpu_custom_call.1} parent=0 // pred_check_branch
    %20 = sbr.rel (0) target = $region21
  $region20: #{tpu_custom_call.1} parent=0 // pred_region
    _
  $region21: #{tpu_custom_call.1} parent=0 // pred_fallthru
    _
  %v21 = vld [vmem:[%s0] sm:$0xff]
  %v22 = vld [vmem:[%s1] sm:$0xff]
  %v23 = vld [vmem:[%s1 + $0x8] sm:$0xff]
  %v24 = vld [vmem:[%s1 + $0x10] sm:$0xff]
  %v25 = vld [vmem:[%s1 + $0x18] sm:$0xff]
  %v26 = vld [vmem:[%s2] sm:$0x1]
  %v28 = vperm.slane %v26, 0
  %vm30 = vcmask 261120
  %v32 = vsel %vm30, %v21, 0
  %34 = vmatpush.msra.mxu0 0.0
  %35 = vmatpush.msra.mxu0 0.0
  %36 = vmatpush.msra.mxu0 0.0
  %37 = vmatpush.msra.mxu0 0.0
  %38 = vmatpush.msra.mxu0 0.0
  %39 = vmatpush.msra.mxu0 0.0
  %40 = vmatpush.msra.mxu0 0.0
  %41 = vmatpush.msra.mxu0 0.0
  %42 = vmatpush.msra.mxu0 0.0
  %43 = vmatpush.msra.mxu0 0.0
  %44 = vmatpush.msra.mxu0 0.0
  %45 = vmatpush.msra.mxu0 0.0
  %46 = vmatpush.msra.mxu0 %v25
  %47 = vmatpush.msra.mxu0 %v24
  %48 = vmatpush.msra.mxu0 %v23
  %49 = vmatpush.msra.mxu0 %v22
  %50 = vmatmul.f32.gmra.mxu0 %v32
  %v51 = vpop.f32.mrf.mxu0
  %v52 = vadd.f32 %v28, %v51
  %53 = vdwg.mxu0
  %v54 = vtanh.pop %v52
  %v55 = vld [vmem:[%s3] sm:$0xff]
  %v56 = vld [vmem:[%s3 + $0x8] sm:$0xff]
  %v57 = vld [vmem:[%s3 + $0x10] sm:$0xff]
  %v58 = vld [vmem:[%s3 + $0x18] sm:$0xff]
  %v59 = vld [vmem:[%s3 + $0x20] sm:$0xff]
  %v60 = vld [vmem:[%s3 + $0x28] sm:$0xff]
  %v61 = vld [vmem:[%s3 + $0x30] sm:$0xff]
  %v62 = vld [vmem:[%s3 + $0x38] sm:$0xff]
  %s63 = sld [smem:[#allocation2]]
  %v64 = vstv %s63
  %vm65 = vcmask 523264
  %v67 = vsel %vm65, %v54, 0
  %69 = vmatpush.msra.mxu0 0.0
  %70 = vmatpush.msra.mxu0 0.0
  %71 = vmatpush.msra.mxu0 0.0
  %72 = vmatpush.msra.mxu0 0.0
  %73 = vmatpush.msra.mxu0 0.0
  %74 = vmatpush.msra.mxu0 0.0
  %75 = vmatpush.msra.mxu0 0.0
  %76 = vmatpush.msra.mxu0 0.0
  %77 = vmatpush.msra.mxu0 %v62
  %78 = vmatpush.msra.mxu0 %v61
  %79 = vmatpush.msra.mxu0 %v60
  %80 = vmatpush.msra.mxu0 %v59
  %81 = vmatpush.msra.mxu0 %v58
  %82 = vmatpush.msra.mxu0 %v57
  %83 = vmatpush.msra.mxu0 %v56
  %84 = vmatpush.msra.mxu0 %v55
  %85 = vmatmul.f32.gmra.mxu0 %v67
  %v86 = vpop.f32.mrf.mxu0
  %v87 = vadd.f32 %v64, %v86
  %88 = vdwg.mxu0
  %v89 = vmul.f32 %v87, 0.5
  %v90 = vand.u32 2147483647, %v87
  %v91 = vmul.f32 %v89, %v90
  %v92 = vmax.f32 %v91, 0.0
  %v93 = vmin.f32 %v92, 0.5
  %v94 = vadd.f32 %v87, -0.5
  %v95 = vmax.f32 %v93, %v94
  %v96 = vmul.f32 %v21, %v21
  %v98 = vsel %vm30, %v96, 0
  %100 = vmatpush.msra.mxu0 0.0
  %101 = vmatpush.msra.mxu0 0.0
  %102 = vmatpush.msra.mxu0 0.0
  %103 = vmatpush.msra.mxu0 0.0
  %104 = vmatpush.msra.mxu0 0.0
  %105 = vmatpush.msra.mxu0 0.0
  %106 = vmatpush.msra.mxu0 0.0
  %107 = vmatpush.msra.mxu0 0.0
  %108 = vmatpush.msra.mxu0 0.0
  %109 = vmatpush.msra.mxu0 0.0
  %110 = vmatpush.msra.mxu0 0.0
  %111 = vmatpush.msra.mxu0 0.0
  %112 = vmatpush.msra.mxu0 1.0
  %113 = vmatpush.msra.mxu0 1.0
  %114 = vmatpush.msra.mxu0 1.0
  %115 = vmatpush.msra.mxu0 1.0
  %116 = vmatmul.f32.gmra.mxu0 %v98
  %v117 = vpop.f32.mrf.mxu0
  %v118 = vadd.f32 0.0, %v117
  %119 = vdwg.mxu0
  %v120 = vmul.f32 %v118, 0.01
  %v121 = vadd.f32 %v95, %v120
  %vm122 = vcmask 7168
  %123 = vst.msk [vmem:[%s5] sm:$0xff] %vm122, %v121
  // Predicated region
  $region22: #{tpu_custom_call.1} parent=0 // pred_check
    _
  $region23: #{tpu_custom_call.1} parent=0 // pred_check_branch
    %125 = sbr.rel (0) target = $region25
  $region24: #{tpu_custom_call.1} parent=0 // pred_region
    _
  $region25: #{tpu_custom_call.1} parent=0 // pred_fallthru
    _
  // Predicated region
  $region26: #{tpu_custom_call.1} parent=0 // pred_check
    _
  $region27: #{tpu_custom_call.1} parent=0 // pred_check_branch
    %127 = sbr.rel (0) target = $region29
  $region28: #{tpu_custom_call.1} parent=0 // pred_region
    _
  $region29: #{tpu_custom_call.1} parent=0 // pred_fallthru
    _

</llo_original>
